<compile_context>
chip_gen: v7x
topology: tpu7x:2x2x1
jax: 0.10.0
libtpu: 0.0.40
codegen_flags: <defaults>
</compile_context>

<pallas_src>
import functools

import jax
import jax.numpy as jnp
from jax import lax
from jax.experimental import pallas as pl
from jax.experimental.pallas import tpu as pltpu


HIDDEN = 64          # module's hidden width (nn.Linear(obs, 64) ... Linear(64, 1))
LANE = 128           # TPU lane width; hidden is zero-padded to this


def _round_up(n, m):
    return ((n + m - 1) // m) * m


def _pad2(a, rows, cols):
    return jnp.pad(a, ((0, rows - a.shape[0]), (0, cols - a.shape[1])))


def _tensorcores_per_chip():
    """2 on v7x (so the 'parallel' batch axis feeds both TensorCores), else 1."""
    try:
        kind = jax.devices()[0].device_kind.lower()
    except Exception:
        return 1
    return 2 if ("v7" in kind or "7x" in kind) else 1


def prepare_params(params, mxu_dtype=jnp.bfloat16):
    """One-time pad/cast of QNetwork parameters for the Pallas kernel.

    Call once (e.g. after each optimizer update), NOT inside the per-step
    forward: under jit these 7 pad/cast ops would otherwise re-run every call.
    Zero padding of the hidden width to 128 is exact through bias / ReLU / the
    final contraction.  Pass mxu_dtype=jnp.float32 for a bit-faithful f32 path.
    """
    D, H = params["w1"].shape
    HP = _round_up(H, LANE)
    return {
        "w1": _pad2(params["w1"], D, HP).astype(mxu_dtype),
        "b1": _pad2(params["b1"], 1, HP).astype(jnp.float32),
        "w2": _pad2(params["w2"], HP, HP).astype(mxu_dtype),
        "b2": _pad2(params["b2"], 1, HP).astype(jnp.float32),
        "w3": _pad2(params["w3"].T, 1, HP).astype(mxu_dtype),   # (1, HP) row
        "b3": params["b3"].reshape(1).astype(jnp.float32),       # SMEM scalar
    }


def _qnet_kernel(x_ref, w1_ref, b1_ref, w2_ref, b2_ref, w3_ref, b3_ref, o_ref):
    """Fused MLP forward for one batch tile.

    x_ref : (blk, D)    f32 (cast to the MXU dtype in-kernel)
    w1    : (D, HP)     mxu dtype     b1 : (1, HP) f32
    w2    : (HP, HP)    mxu dtype     b2 : (1, HP) f32
    w3    : (1, HP) row mxu dtype     b3 : (1,)    f32 scalar in SMEM
    o_ref : (1, 1, blk) f32  (lane-dense row of Q-values for this tile)

    NOTE: rows past B in the last (ragged) tile hold unspecified data; they are
    never reduced over in-kernel and are sliced off by the wrapper.
    """
    x = x_ref[...].astype(w1_ref.dtype)      # in-kernel VPU cast (no extra XLA op)

    # Layer 1: (blk, D) @ (D, HP) -> (blk, HP); f32 accumulate, f32 bias+ReLU,
    # then eager cast to the MXU dtype so no (blk, HP) f32 intermediate lives on.
    h1 = jnp.dot(x, w1_ref[...], preferred_element_type=jnp.float32)
    h1 = jnp.maximum(h1 + b1_ref[...], 0.0).astype(w2_ref.dtype)

    # Layer 2: (blk, HP) @ (HP, HP) -> (blk, HP).
    h2 = jnp.dot(h1, w2_ref[...], preferred_element_type=jnp.float32)
    h2 = jnp.maximum(h2 + b2_ref[...], 0.0).astype(w3_ref.dtype)

    # Layer 3: contract the hidden axis of h2 against the w3 row:
    #   (1, HP) . (blk, HP)^T -> (1, blk)   (lane-dense result, unmasked vst)
    r = lax.dot_general(
        w3_ref[...], h2,
        dimension_numbers=(((1,), (1,)), ((), ())),
        preferred_element_type=jnp.float32,
    )
    r = r + b3_ref[0]                        # scalar bias from SMEM

    o_ref[0] = r.astype(o_ref.dtype)         # (1, blk) store, full lane width


@functools.partial(jax.jit, static_argnames=("block_b", "min_tiles"))
def qnetwork_forward(x, prepared, block_b=2048, min_tiles=None):
    """x: (B, D) f32.  prepared: output of prepare_params().  Returns (B, 1) f32.

    min_tiles: minimum number of batch tiles on the 'parallel' grid axis.
      None -> auto (2 on v7x so both TensorCores are used, 1 on v5e/v6e where
      the grid is a serial loop and fewer/bigger tiles amortize per-step cost).
    block_b: upper bound on the batch tile; 2048 stays far under VMEM on every
      generation (including v7x's 64 MiB), so there is no need to shrink it.
    """
    B, D = x.shape
    HP = prepared["w1"].shape[1]
    assert prepared["w1"].shape[0] == D, "prepared params do not match obs_dim"

    if min_tiles is None:
        min_tiles = _tensorcores_per_chip()
    min_tiles = max(1, int(min_tiles))

    # Batch tile: split across min_tiles cores, multiple of 8, capped by block_b
    # and by the (rounded) batch itself.
    blk = _round_up(pl.cdiv(B, min_tiles), 8)
    blk = max(8, min(blk, max(8, block_b), _round_up(B, 8)))
    num_tiles = pl.cdiv(B, blk)

    w1, b1 = prepared["w1"], prepared["b1"]
    w2, b2 = prepared["w2"], prepared["b2"]
    w3, b3 = prepared["w3"], prepared["b3"]

    const2d = lambda shape: pl.BlockSpec(shape, lambda i: (0, 0))

    flops = 2 * B * (D * HP + HP * HP + HP)
    bytes_accessed = (
        x.size * x.dtype.itemsize
        + sum(v.size * v.dtype.itemsize for v in (w1, b1, w2, b2, w3, b3))
        + num_tiles * blk * 4
    )

    out = pl.pallas_call(
        _qnet_kernel,
        out_shape=jax.ShapeDtypeStruct((num_tiles, 1, blk), jnp.float32),
        grid_spec=pltpu.PrefetchScalarGridSpec(
            num_scalar_prefetch=0,
            grid=(num_tiles,),
            in_specs=[
                pl.BlockSpec((blk, D), lambda i: (i, 0)),            # x tile (f32)
                const2d((D, HP)),                                    # w1
                const2d((1, HP)),                                    # b1
                const2d((HP, HP)),                                   # w2
                const2d((1, HP)),                                    # b2
                const2d((1, HP)),                                    # w3 row
                pl.BlockSpec(memory_space=pltpu.MemorySpace.SMEM),   # b3 scalar
            ],
            out_specs=pl.BlockSpec((1, 1, blk), lambda i: (i, 0, 0)),
        ),
        compiler_params=pltpu.CompilerParams(
            dimension_semantics=("parallel",),
        ),
        cost_estimate=pl.CostEstimate(
            flops=flops, transcendentals=0, bytes_accessed=bytes_accessed),
    )(x, w1, b1, w2, b2, w3, b3)

    # (num_tiles, 1, blk) -> (B, 1); tail rows of the last tile are padding.
    # Always f32, matching the f32 PyTorch module output.
    return out.reshape(num_tiles * blk)[:B].reshape(B, 1)


def xavier_uniform(key, fan_in, fan_out, dtype=jnp.float32):
    # Matches torch.nn.init.xavier_uniform_ (gain=1): U(-a, a), a = sqrt(6/(fan_in+fan_out))
    a = (6.0 / (fan_in + fan_out)) ** 0.5
    return jax.random.uniform(key, (fan_in, fan_out), dtype=dtype, minval=-a, maxval=a)


def init_params(key, obs_dim):
    k1, k2, k3 = jax.random.split(key, 3)
    return {
        "w1": xavier_uniform(k1, obs_dim, HIDDEN),
        "b1": jnp.zeros((1, HIDDEN), jnp.float32),
        "w2": xavier_uniform(k2, HIDDEN, HIDDEN),
        "b2": jnp.zeros((1, HIDDEN), jnp.float32),
        "w3": xavier_uniform(k3, HIDDEN, 1),
        "b3": jnp.zeros((1, 1), jnp.float32),
    }


def reference_forward(x, params, mxu_dtype=None):
    """Pure-JAX reference; mxu_dtype applies the same MXU-input casting as the kernel."""
    dt = x.dtype if mxu_dtype is None else mxu_dtype
    h1 = jnp.dot(x.astype(dt), params["w1"].astype(dt),
                 preferred_element_type=jnp.float32) + params["b1"]
    h1 = jnp.maximum(h1, 0.0)
    h2 = jnp.dot(h1.astype(dt), params["w2"].astype(dt),
                 preferred_element_type=jnp.float32) + params["b2"]
    h2 = jnp.maximum(h2, 0.0)
    return jnp.dot(h2.astype(dt), params["w3"].astype(dt),
                   preferred_element_type=jnp.float32) + params["b3"]


if __name__ == "__main__":
    key = jax.random.PRNGKey(0)
    k_x, k_p = jax.random.split(key)

    batch, obs_dim = 128, 16   # env.single_observation_space.shape[-1] == 16
    x = jax.random.normal(k_x, (batch, obs_dim), dtype=jnp.float32)
    params = init_params(k_p, obs_dim)

    # One-time parameter preparation (hoisted out of the per-call path).
    prepared_bf16 = prepare_params(params)                         # default bf16 MXU inputs
    prepared_f32 = prepare_params(params, mxu_dtype=jnp.float32)   # exact f32 path

    ref_cast = reference_forward(x, params, mxu_dtype=jnp.bfloat16)
    ref_f32 = reference_forward(x, params)

    # Default path: auto grid (>=2 tiles on v7x, 1 big tile on v5e/v6e).
    out = jax.block_until_ready(qnetwork_forward(x, prepared_bf16))
    assert out.shape == (batch, 1) and out.dtype == jnp.float32, (out.shape, out.dtype)
    assert jnp.allclose(out, ref_cast, atol=1e-4, rtol=1e-4)
    assert jnp.allclose(out, ref_f32, atol=5e-2, rtol=5e-2)

    # f32 MXU path (loose tolerance: XLA reference matmul precision may differ).
    out_f32 = jax.block_until_ready(qnetwork_forward(x, prepared_f32))
    assert jnp.allclose(out_f32, ref_f32, atol=2e-2, rtol=2e-2)

    # Forced multi-tile "parallel" grid (as used on v7x).
    out_multi = jax.block_until_ready(qnetwork_forward(x, prepared_bf16, min_tiles=2))
    assert jnp.allclose(out_multi, ref_cast, atol=1e-4, rtol=1e-4)

    # Ragged batch tail + small block cap (multi grid steps, partial last tile).
    x_ragged = x[:100]
    out_ragged = jax.block_until_ready(
        qnetwork_forward(x_ragged, prepared_bf16, block_b=64, min_tiles=1))
    assert out_ragged.shape == (100, 1)
    assert jnp.allclose(out_ragged, ref_cast[:100], atol=1e-4, rtol=1e-4)

    print("KERNEL_OK")
</pallas_src>

<mosaic_0001>
module attributes {stable_mosaic.version = 11 : i64} {
  func.func @_qnet_kernel(%arg0: i32, %arg1: memref<128x16xf32, #tpu.memory_space<vmem>>, %arg2: memref<16x128xbf16, #tpu.memory_space<vmem>>, %arg3: memref<1x128xf32, #tpu.memory_space<vmem>>, %arg4: memref<128x128xbf16, #tpu.memory_space<vmem>>, %arg5: memref<1x128xf32, #tpu.memory_space<vmem>>, %arg6: memref<1x128xbf16, #tpu.memory_space<vmem>>, %arg7: memref<1xf32, #tpu.memory_space<smem>>, %arg8: memref<1x1x128xf32, #tpu.memory_space<vmem>>) attributes {dimension_semantics = [#tpu.dimension_semantics<parallel>], iteration_bounds = array<i64: 1>, scalar_prefetch = 0 : i64, scratch_operands = 0 : i64, tpu.core_type = #tpu.core_type<tc>, window_params = [{transform_indices = @transform_0, window_bounds = array<i64: 128, 16>}, {pipeline_mode = #tpu.pipeline_mode<synchronous>, transform_indices = @transform_1, window_bounds = array<i64: 16, 128>}, {pipeline_mode = #tpu.pipeline_mode<synchronous>, transform_indices = @transform_2, window_bounds = array<i64: 1, 128>}, {pipeline_mode = #tpu.pipeline_mode<synchronous>, transform_indices = @transform_3, window_bounds = array<i64: 128, 128>}, {pipeline_mode = #tpu.pipeline_mode<synchronous>, transform_indices = @transform_4, window_bounds = array<i64: 1, 128>}, {pipeline_mode = #tpu.pipeline_mode<synchronous>, transform_indices = @transform_5, window_bounds = array<i64: 1, 128>}, {transform_indices = @transform_6, window_bounds = array<i64: 1>}, {transform_indices = @transform_7, window_bounds = array<i64: 1, 1, 128>}]} {
    %c0 = arith.constant 0 : index
    %c0_0 = arith.constant 0 : index
    %0 = vector.load %arg1[%c0, %c0_0] : memref<128x16xf32, #tpu.memory_space<vmem>>, vector<128x16xf32>
    %1 = arith.truncf %0 : vector<128x16xf32> to vector<128x16xbf16>
    %c0_1 = arith.constant 0 : index
    %c0_2 = arith.constant 0 : index
    %2 = vector.load %arg2[%c0_1, %c0_2] : memref<16x128xbf16, #tpu.memory_space<vmem>>, vector<16x128xbf16>
    %cst = arith.constant dense<0.000000e+00> : vector<128x128xf32>
    %3 = tpu.matmul %1, %2, %cst {dimension_numbers = #tpu.dot_dimension_numbers<[1], [0], [0], [1], [0, 0, 1, 1], [], []>} : vector<128x16xbf16>, vector<16x128xbf16>, vector<128x128xf32> -> vector<128x128xf32>
    %c0_3 = arith.constant 0 : index
    %c0_4 = arith.constant 0 : index
    %4 = vector.load %arg3[%c0_3, %c0_4] : memref<1x128xf32, #tpu.memory_space<vmem>>, vector<1x128xf32>
    %5 = vector.broadcast %4 : vector<1x128xf32> to vector<128x128xf32>
    %6 = arith.addf %3, %5 : vector<128x128xf32>
    %cst_5 = arith.constant 0.000000e+00 : f32
    %7 = vector.broadcast %cst_5 : f32 to vector<128x128xf32>
    %8 = arith.maximumf %6, %7 : vector<128x128xf32>
    %9 = arith.truncf %8 : vector<128x128xf32> to vector<128x128xbf16>
    %c0_6 = arith.constant 0 : index
    %c0_7 = arith.constant 0 : index
    %10 = vector.load %arg4[%c0_6, %c0_7] : memref<128x128xbf16, #tpu.memory_space<vmem>>, vector<128x128xbf16>
    %cst_8 = arith.constant dense<0.000000e+00> : vector<128x128xf32>
    %11 = tpu.matmul %9, %10, %cst_8 {dimension_numbers = #tpu.dot_dimension_numbers<[1], [0], [0], [1], [0, 0, 1, 1], [], []>} : vector<128x128xbf16>, vector<128x128xbf16>, vector<128x128xf32> -> vector<128x128xf32>
    %c0_9 = arith.constant 0 : index
    %c0_10 = arith.constant 0 : index
    %12 = vector.load %arg5[%c0_9, %c0_10] : memref<1x128xf32, #tpu.memory_space<vmem>>, vector<1x128xf32>
    %13 = vector.broadcast %12 : vector<1x128xf32> to vector<128x128xf32>
    %14 = arith.addf %11, %13 : vector<128x128xf32>
    %cst_11 = arith.constant 0.000000e+00 : f32
    %15 = vector.broadcast %cst_11 : f32 to vector<128x128xf32>
    %16 = arith.maximumf %14, %15 : vector<128x128xf32>
    %17 = arith.truncf %16 : vector<128x128xf32> to vector<128x128xbf16>
    %c0_12 = arith.constant 0 : index
    %c0_13 = arith.constant 0 : index
    %18 = vector.load %arg6[%c0_12, %c0_13] : memref<1x128xbf16, #tpu.memory_space<vmem>>, vector<1x128xbf16>
    %cst_14 = arith.constant dense<0.000000e+00> : vector<1x128xf32>
    %19 = tpu.matmul %18, %17, %cst_14 {dimension_numbers = #tpu.dot_dimension_numbers<[1], [1], [0], [0], [0, 0, 1, 0], [], []>} : vector<1x128xbf16>, vector<128x128xbf16>, vector<1x128xf32> -> vector<1x128xf32>
    %c0_15 = arith.constant 0 : index
    %20 = memref.load %arg7[%c0_15] : memref<1xf32, #tpu.memory_space<smem>>
    %21 = vector.broadcast %20 : f32 to vector<1x128xf32>
    %22 = arith.addf %19, %21 : vector<1x128xf32>
    %c0_16 = arith.constant 0 : index
    %c0_17 = arith.constant 0 : index
    %c0_18 = arith.constant 0 : index
    %23 = vector.load %arg8[%c0_16, %c0_17, %c0_18] : memref<1x1x128xf32, #tpu.memory_space<vmem>>, vector<1x1x128xf32>
    %24 = vector.shape_cast %23 : vector<1x1x128xf32> to vector<1x128xf32>
    %25 = vector.shape_cast %22 : vector<1x128xf32> to vector<1x1x128xf32>
    tpu.vector_store %arg8[%c0_16, %c0_17, %c0_18], %25 {strides = array<i32>} : memref<1x1x128xf32, #tpu.memory_space<vmem>>, vector<1x1x128xf32>,
    return
  }
  func.func @transform_0(%arg0: i32) -> (i32, i32) {
    %c0_i32 = arith.constant 0 : i32
    %c0_i32_0 = arith.constant 0 : i32
    return %arg0, %c0_i32 : i32, i32
  }
  func.func @transform_1(%arg0: i32) -> (i32, i32) {
    %c0_i32 = arith.constant 0 : i32
    %c0_i32_0 = arith.constant 0 : i32
    %c0_i32_1 = arith.constant 0 : i32
    return %c0_i32, %c0_i32_0 : i32, i32
  }
  func.func @transform_2(%arg0: i32) -> (i32, i32) {
    %c0_i32 = arith.constant 0 : i32
    %c0_i32_0 = arith.constant 0 : i32
    %c0_i32_1 = arith.constant 0 : i32
    return %c0_i32, %c0_i32_0 : i32, i32
  }
  func.func @transform_3(%arg0: i32) -> (i32, i32) {
    %c0_i32 = arith.constant 0 : i32
    %c0_i32_0 = arith.constant 0 : i32
    %c0_i32_1 = arith.constant 0 : i32
    return %c0_i32, %c0_i32_0 : i32, i32
  }
  func.func @transform_4(%arg0: i32) -> (i32, i32) {
    %c0_i32 = arith.constant 0 : i32
    %c0_i32_0 = arith.constant 0 : i32
    %c0_i32_1 = arith.constant 0 : i32
    return %c0_i32, %c0_i32_0 : i32, i32
  }
  func.func @transform_5(%arg0: i32) -> (i32, i32) {
    %c0_i32 = arith.constant 0 : i32
    %c0_i32_0 = arith.constant 0 : i32
    %c0_i32_1 = arith.constant 0 : i32
    return %c0_i32, %c0_i32_0 : i32, i32
  }
  func.func @transform_6(%arg0: i32) -> i32 {
    %c0_i32 = arith.constant 0 : i32
    %c0_i32_0 = arith.constant 0 : i32
    return %c0_i32 : i32
  }
  func.func @transform_7(%arg0: i32) -> (i32, i32, i32) {
    %c0_i32 = arith.constant 0 : i32
    %c0_i32_0 = arith.constant 0 : i32
    %c0_i32_1 = arith.constant 0 : i32
    return %arg0, %c0_i32, %c0_i32_0 : i32, i32, i32
  }
}

</mosaic_0001>

<llo_original>
// kernel: qnetwork_forward.1
$region0: #{qnetwork_forward.1}
  #allocation0 [shape = 'u32[]', space=smem, size = 0x4, offset = 0x4, fixed_abs, tag = 'smem constant byte address 0x4 - core index']
  #allocation1 [shape = 'u32[144,128]{1,0:T(1,128)}', space=vmem, size = 0x12000, scoped, tag = 'internal scratch']
  #allocation2 [shape = 'f32[1]{0:T(128)S(6)}', space=smem, size = 0x200, scoped, tag = 'scoped memory for qnetwork_forward.1']
  %s0 = inlined_call_operand.vmem [shape: f32[128,16], index: 0, kind: input, shape index: {}]
  %s1 = inlined_call_operand.vmem [shape: bf16[16,128], index: 1, kind: input, shape index: {}]
  %s2 = inlined_call_operand.vmem [shape: f32[1,128], index: 2, kind: input, shape index: {}]
  %s3 = inlined_call_operand.vmem [shape: bf16[128,128], index: 3, kind: input, shape index: {}]
  %s4 = inlined_call_operand.vmem [shape: f32[1,128], index: 4, kind: input, shape index: {}]
  %s5 = inlined_call_operand.vmem [shape: bf16[1,128], index: 5, kind: input, shape index: {}]
  %s6 = inlined_call_operand.<no memory space> [shape: f32[1], index: 6, kind: input, shape index: {}]
  %s7 = inlined_call_operand.hbm [shape: f32[1,1,128], index: 7, kind: output, shape index: {}]
  %s8 = sld [smem:[#allocation0]]
  $region38: #{qnetwork_forward.1} parent=0
    _
  %s10 = ssub.s32 1, %s8
  %s11 = scalar_select 0, %s10, %s8
  %12 = sst [smem:[#allocation2]] %s6
  $region1: #{qnetwork_forward.1} parent=0
    #allocation3 [shape = 'u8[512]{0}', space=vmem, size = 0x400, scoped, tag = 'output window, operand 0, single buffered']
    #allocation4 [shape = 's32[1]{0}', space=sflag, size = 0x4, scoped, tag = 'scoped memory for qnetwork_forward.1']
    %13 = vsyncpa [#allocation4], 0
    // Predicated region
    $region2: #{qnetwork_forward.1} parent=1 // pred_check
      _
    $region3: #{qnetwork_forward.1} parent=1 // pred_check_branch
      %15 = sbr.rel (0) target = $region5
    $region4: #{qnetwork_forward.1} parent=1 // pred_region
      _
    $region5: #{qnetwork_forward.1} parent=1 // pred_fallthru
      _
    // Predicated region
    $region6: #{qnetwork_forward.1} parent=1 // pred_check
      _
    $region7: #{qnetwork_forward.1} parent=1 // pred_check_branch
      %17 = sbr.rel (0) target = $region9
    $region8: #{qnetwork_forward.1} parent=1 // pred_region
      _
    $region9: #{qnetwork_forward.1} parent=1 // pred_fallthru
      _
    // Predicated region
    $region10: #{qnetwork_forward.1} parent=1 // pred_check
      _
    $region11: #{qnetwork_forward.1} parent=1 // pred_check_branch
      %19 = sbr.rel (0) target = $region13
    $region12: #{qnetwork_forward.1} parent=1 // pred_region
      _
    $region13: #{qnetwork_forward.1} parent=1 // pred_fallthru
      _
    // Predicated region
    $region14: #{qnetwork_forward.1} parent=1 // pred_check
      _
    $region15: #{qnetwork_forward.1} parent=1 // pred_check_branch
      %21 = sbr.rel (0) target = $region17
    $region16: #{qnetwork_forward.1} parent=1 // pred_region
      _
    $region17: #{qnetwork_forward.1} parent=1 // pred_fallthru
      _
    // Predicated region
    $region18: #{qnetwork_forward.1} parent=1 // pred_check
      _
    $region19: #{qnetwork_forward.1} parent=1 // pred_check_branch
      %23 = sbr.rel (0) target = $region21
    $region20: #{qnetwork_forward.1} parent=1 // pred_region
      _
    $region21: #{qnetwork_forward.1} parent=1 // pred_fallthru
      _
    // Predicated region
    $region22: #{qnetwork_forward.1} parent=1 // pred_check
      _
    $region23: #{qnetwork_forward.1} parent=1 // pred_check_branch
      %25 = sbr.rel (0) target = $region25
    $region24: #{qnetwork_forward.1} parent=1 // pred_region
      _
    $region25: #{qnetwork_forward.1} parent=1 // pred_fallthru
      _
    // Predicated region
    $region26: #{qnetwork_forward.1} parent=1 // pred_check
      _
    $region27: #{qnetwork_forward.1} parent=1 // pred_check_branch
      %27 = sbr.rel (0) target = $region29
    $region28: #{qnetwork_forward.1} parent=1 // pred_region
      _
    $region29: #{qnetwork_forward.1} parent=1 // pred_fallthru
      _
    %v29 = vld [vmem:[%s0] sm:$0xff]
    %v30 = vld [vmem:[%s0 + $0x8] sm:$0xff]
    %v31 = vld [vmem:[%s0 + $0x10] sm:$0xff]
    %v32 = vld [vmem:[%s0 + $0x18] sm:$0xff]
    %v33 = vld [vmem:[%s0 + $0x20] sm:$0xff]
    %v34 = vld [vmem:[%s0 + $0x28] sm:$0xff]
    %v35 = vld [vmem:[%s0 + $0x30] sm:$0xff]
    %v36 = vld [vmem:[%s0 + $0x38] sm:$0xff]
    %v37 = vld [vmem:[%s0 + $0x40] sm:$0xff]
    %v38 = vld [vmem:[%s0 + $0x48] sm:$0xff]
    %v39 = vld [vmem:[%s0 + $0x50] sm:$0xff]
    %v40 = vld [vmem:[%s0 + $0x58] sm:$0xff]
    %v41 = vld [vmem:[%s0 + $0x60] sm:$0xff]
    %v42 = vld [vmem:[%s0 + $0x68] sm:$0xff]
    %v43 = vld [vmem:[%s0 + $0x70] sm:$0xff]
    %v44 = vld [vmem:[%s0 + $0x78] sm:$0xff]
    %v45 = vpack.c.bf16 %v30, %v29
    %v46 = vpack.c.bf16 %v32, %v31
    %v47 = vpack.c.bf16 %v34, %v33
    %v48 = vpack.c.bf16 %v36, %v35
    %v49 = vpack.c.bf16 %v38, %v37
    %v50 = vpack.c.bf16 %v40, %v39
    %v51 = vpack.c.bf16 %v42, %v41
    %v52 = vpack.c.bf16 %v44, %v43
    %v53 = vld [vmem:[%s1] sm:$0xf]
    %v54 = vld [vmem:[%s1 + $0x4] sm:$0xf]
    %v55 = vld [vmem:[%s2] sm:$0x1]
    %v57 = vlaneseq
    %v58 = vshrl.u32 %v57, 7
    %v59 = vsub.s32 0, %v58
    %v60 = vrot.slane %v55, %v59
    %v64 = vunpack.c.l.b16 %v53
    %v65 = vunpack.c.l.b16 %v54
    %v66 = vpack.c.b16 %v65, %v64
    %vm68 = vcmask 130048
    %v70 = vsel %vm68, %v45, 0
    %v73 = vsel %vm68, %v46, 0
    %v76 = vsel %vm68, %v47, 0
    %v79 = vsel %vm68, %v48, 0
    %v82 = vsel %vm68, %v49, 0
    %v85 = vsel %vm68, %v50, 0
    %v88 = vsel %vm68, %v51, 0
    %v91 = vsel %vm68, %v52, 0
    %93 = vmatprep.subr.bf16.mxu0 0
    %94 = vmatpush1.bf16.msra.mxu0 %v66
    %95 = vmatprep.subr.bf16.mxu0 0
    %96 = vmatpush1.bf16.msra.mxu0 0
    %97 = vmatprep.subr.bf16.mxu0 0
    %98 = vmatpush1.bf16.msra.mxu0 0
    %99 = vmatprep.subr.bf16.mxu0 0
    %100 = vmatpush1.bf16.msra.mxu0 0
    %101 = vmatprep.subr.bf16.mxu0 0
    %102 = vmatpush1.bf16.msra.mxu0 0
    %103 = vmatprep.subr.bf16.mxu0 0
    %104 = vmatpush1.bf16.msra.mxu0 0
    %105 = vmatprep.subr.bf16.mxu0 0
    %106 = vmatpush1.bf16.msra.mxu0 0
    %107 = vmatprep.subr.bf16.mxu0 0
    %108 = vmatpush1.bf16.msra.mxu0 0
    %109 = vmatprep.subr.bf16.mxu0 0
    %110 = vmatpush1.bf16.msra.mxu0 0
    %111 = vmatprep.subr.bf16.mxu0 0
    %112 = vmatpush1.bf16.msra.mxu0 0
    %113 = vmatprep.subr.bf16.mxu0 0
    %114 = vmatpush1.bf16.msra.mxu0 0
    %115 = vmatprep.subr.bf16.mxu0 0
    %116 = vmatpush1.bf16.msra.mxu0 0
    %117 = vmatprep.subr.bf16.mxu0 0
    %118 = vmatpush1.bf16.msra.mxu0 0
    %119 = vmatprep.subr.bf16.mxu0 0
    %120 = vmatpush1.bf16.msra.mxu0 0
    %121 = vmatprep.subr.bf16.mxu0 0
    %122 = vmatpush1.bf16.msra.mxu0 0
    %123 = vmatprep.subr.bf16.mxu0 0
    %124 = vmatpush1.bf16.msra.mxu0 0
    %125 = vmatprep.mubr.bf16.mxu0 0
    %126 = vmatmul.mubr.bf16.gmra.mrb[0].mxu0 %v70
    %v127 = vpop.f32.mrb[0].mxu0
    %v128 = vadd.f32 %v60, %v127
    %v129 = vpop.f32.mrb[0].mxu0
    %v130 = vpop.f32.mrb[0].mxu0
    %v131 = vadd.f32 %v60, %v130
    %v132 = vpop.f32.mrb[0].mxu0
    %133 = vmatprep.mubr.bf16.mxu0 0
    %134 = vmatmul.mubr.bf16.gmra.mrb[0].mxu0 %v73
    %v135 = vpop.f32.mrb[0].mxu0
    %v136 = vadd.f32 %v60, %v135
    %v137 = vpop.f32.mrb[0].mxu0
    %v138 = vpop.f32.mrb[0].mxu0
    %v139 = vadd.f32 %v60, %v138
    %v140 = vpop.f32.mrb[0].mxu0
    %141 = vmatprep.mubr.bf16.mxu0 0
    %142 = vmatmul.mubr.bf16.gmra.mrb[0].mxu0 %v76
    %v143 = vpop.f32.mrb[0].mxu0
    %v144 = vadd.f32 %v60, %v143
    %v145 = vpop.f32.mrb[0].mxu0
    %v146 = vpop.f32.mrb[0].mxu0
    %v147 = vadd.f32 %v60, %v146
    %v148 = vpop.f32.mrb[0].mxu0
    %149 = vmatprep.mubr.bf16.mxu0 0
    %150 = vmatmul.mubr.bf16.gmra.mrb[0].mxu0 %v79
    %v151 = vpop.f32.mrb[0].mxu0
    %v152 = vadd.f32 %v60, %v151
    %v153 = vpop.f32.mrb[0].mxu0
    %v154 = vpop.f32.mrb[0].mxu0
    %v155 = vadd.f32 %v60, %v154
    %v156 = vpop.f32.mrb[0].mxu0
    %157 = vmatprep.mubr.bf16.mxu0 0
    %158 = vmatmul.mubr.bf16.gmra.mrb[0].mxu0 %v82
    %v159 = vpop.f32.mrb[0].mxu0
    %v160 = vadd.f32 %v60, %v159
    %v161 = vpop.f32.mrb[0].mxu0
    %v162 = vpop.f32.mrb[0].mxu0
    %v163 = vadd.f32 %v60, %v162
    %v164 = vpop.f32.mrb[0].mxu0
    %165 = vmatprep.mubr.bf16.mxu0 0
    %166 = vmatmul.mubr.bf16.gmra.mrb[0].mxu0 %v85
    %v167 = vpop.f32.mrb[0].mxu0
    %v168 = vadd.f32 %v60, %v167
    %v169 = vpop.f32.mrb[0].mxu0
    %v170 = vpop.f32.mrb[0].mxu0
    %v171 = vadd.f32 %v60, %v170
    %v172 = vpop.f32.mrb[0].mxu0
    %173 = vmatprep.mubr.bf16.mxu0 0
    %174 = vmatmul.mubr.bf16.gmra.mrb[0].mxu0 %v88
    %v175 = vpop.f32.mrb[0].mxu0
    %v176 = vadd.f32 %v60, %v175
    %v177 = vpop.f32.mrb[0].mxu0
    %v178 = vpop.f32.mrb[0].mxu0
    %v179 = vadd.f32 %v60, %v178
    %v180 = vpop.f32.mrb[0].mxu0
    %181 = vmatprep.mubr.bf16.mxu0 0
    %182 = vmatmul.mubr.bf16.gmra.mrb[0].mxu0 %v91
    %v183 = vpop.f32.mrb[0].mxu0
    %v184 = vadd.f32 %v60, %v183
    %v185 = vpop.f32.mrb[0].mxu0
    %v186 = vpop.f32.mrb[0].mxu0
    %v187 = vadd.f32 %v60, %v186
    %v188 = vpop.f32.mrb[0].mxu0
    %189 = vdwg.mxu0
    %v190 = vmax.f32 %v128, 0.0
    %v191 = vmax.f32 %v131, 0.0
    %v192 = vmax.f32 %v136, 0.0
    %v193 = vmax.f32 %v139, 0.0
    %v194 = vmax.f32 %v144, 0.0
    %v195 = vmax.f32 %v147, 0.0
    %v196 = vmax.f32 %v152, 0.0
    %v197 = vmax.f32 %v155, 0.0
    %v198 = vmax.f32 %v160, 0.0
    %v199 = vmax.f32 %v163, 0.0
    %v200 = vmax.f32 %v168, 0.0
    %v201 = vmax.f32 %v171, 0.0
    %v202 = vmax.f32 %v176, 0.0
    %v203 = vmax.f32 %v179, 0.0
    %v204 = vmax.f32 %v184, 0.0
    %v205 = vmax.f32 %v187, 0.0
    %v206 = vpack.c.bf16 %v191, %v190
    %v207 = vpack.c.bf16 %v193, %v192
    %v208 = vpack.c.bf16 %v195, %v194
    %v209 = vpack.c.bf16 %v197, %v196
    %v210 = vpack.c.bf16 %v199, %v198
    %v211 = vpack.c.bf16 %v201, %v200
    %v212 = vpack.c.bf16 %v203, %v202
    %v213 = vpack.c.bf16 %v205, %v204
    %v214 = vld [vmem:[%s3] sm:$0xf]
    %v215 = vld [vmem:[%s3 + $0x4] sm:$0xf]
    %v216 = vld [vmem:[%s3 + $0x8] sm:$0xf]
    %v217 = vld [vmem:[%s3 + $0xc] sm:$0xf]
    %v218 = vld [vmem:[%s3 + $0x10] sm:$0xf]
    %v219 = vld [vmem:[%s3 + $0x14] sm:$0xf]
    %v220 = vld [vmem:[%s3 + $0x18] sm:$0xf]
    %v221 = vld [vmem:[%s3 + $0x1c] sm:$0xf]
    %v222 = vld [vmem:[%s3 + $0x20] sm:$0xf]
    %v223 = vld [vmem:[%s3 + $0x24] sm:$0xf]
    %v224 = vld [vmem:[%s3 + $0x28] sm:$0xf]
    %v225 = vld [vmem:[%s3 + $0x2c] sm:$0xf]
    %v226 = vld [vmem:[%s3 + $0x30] sm:$0xf]
    %v227 = vld [vmem:[%s3 + $0x34] sm:$0xf]
    %v228 = vld [vmem:[%s3 + $0x38] sm:$0xf]
    %v229 = vld [vmem:[%s3 + $0x3c] sm:$0xf]
    %v230 = vld [vmem:[%s4] sm:$0x1]
    %v232 = vlaneseq
    %v233 = vshrl.u32 %v232, 7
    %v234 = vsub.s32 0, %v233
    %v235 = vrot.slane %v230, %v234
    %v253 = vunpack.c.l.b16 %v214
    %v254 = vunpack.c.l.b16 %v215
    %v255 = vunpack.c.l.b16 %v216
    %v256 = vunpack.c.l.b16 %v217
    %v257 = vunpack.c.l.b16 %v218
    %v258 = vunpack.c.l.b16 %v219
    %v259 = vunpack.c.l.b16 %v220
    %v260 = vunpack.c.l.b16 %v221
    %v261 = vunpack.c.l.b16 %v222
    %v262 = vunpack.c.l.b16 %v223
    %v263 = vunpack.c.l.b16 %v224
    %v264 = vunpack.c.l.b16 %v225
    %v265 = vunpack.c.l.b16 %v226
    %v266 = vunpack.c.l.b16 %v227
    %v267 = vunpack.c.l.b16 %v228
    %v268 = vunpack.c.l.b16 %v229
    %v269 = vpack.c.b16 %v254, %v253
    %v270 = vpack.c.b16 %v256, %v255
    %v271 = vpack.c.b16 %v258, %v257
    %v272 = vpack.c.b16 %v260, %v259
    %v273 = vpack.c.b16 %v262, %v261
    %v274 = vpack.c.b16 %v264, %v263
    %v275 = vpack.c.b16 %v266, %v265
    %v276 = vpack.c.b16 %v268, %v267
    %285 = vmatprep.subr.bf16.mxu0 0
    %286 = vmatpush1.bf16.msra.mxu0 %v269
    %287 = vmatprep.subr.bf16.mxu0 0
    %288 = vmatpush1.bf16.msra.mxu0 %v270
    %289 = vmatprep.subr.bf16.mxu0 0
    %290 = vmatpush1.bf16.msra.mxu0 %v271
    %291 = vmatprep.subr.bf16.mxu0 0
    %292 = vmatpush1.bf16.msra.mxu0 %v272
    %293 = vmatprep.subr.bf16.mxu0 0
    %294 = vmatpush1.bf16.msra.mxu0 %v273
    %295 = vmatprep.subr.bf16.mxu0 0
    %296 = vmatpush1.bf16.msra.mxu0 %v274
    %297 = vmatprep.subr.bf16.mxu0 0
    %298 = vmatpush1.bf16.msra.mxu0 %v275
    %299 = vmatprep.subr.bf16.mxu0 0
    %300 = vmatpush1.bf16.msra.mxu0 %v276
    %301 = vmatprep.subr.bf16.mxu0 0
    %302 = vmatpush1.bf16.msra.mxu0 0
    %303 = vmatprep.subr.bf16.mxu0 0
    %304 = vmatpush1.bf16.msra.mxu0 0
    %305 = vmatprep.subr.bf16.mxu0 0
    %306 = vmatpush1.bf16.msra.mxu0 0
    %307 = vmatprep.subr.bf16.mxu0 0
    %308 = vmatpush1.bf16.msra.mxu0 0
    %309 = vmatprep.subr.bf16.mxu0 0
    %310 = vmatpush1.bf16.msra.mxu0 0
    %311 = vmatprep.subr.bf16.mxu0 0
    %312 = vmatpush1.bf16.msra.mxu0 0
    %313 = vmatprep.subr.bf16.mxu0 0
    %314 = vmatpush1.bf16.msra.mxu0 0
    %315 = vmatprep.subr.bf16.mxu0 0
    %316 = vmatpush1.bf16.msra.mxu0 0
    %317 = vmatprep.mubr.bf16.mxu0 0
    %318 = vmatmul.mubr.bf16.gmra.mrb[0].mxu0 %v206
    %v319 = vpop.f32.mrb[0].mxu0
    %v320 = vadd.f32 %v235, %v319
    %v321 = vpop.f32.mrb[0].mxu0
    %v322 = vpop.f32.mrb[0].mxu0
    %v323 = vadd.f32 %v235, %v322
    %v324 = vpop.f32.mrb[0].mxu0
    %325 = vmatprep.mubr.bf16.mxu0 0
    %326 = vmatmul.mubr.bf16.gmra.mrb[0].mxu0 %v207
    %v327 = vpop.f32.mrb[0].mxu0
    %v328 = vadd.f32 %v235, %v327
    %v329 = vpop.f32.mrb[0].mxu0
    %v330 = vpop.f32.mrb[0].mxu0
    %v331 = vadd.f32 %v235, %v330
    %v332 = vpop.f32.mrb[0].mxu0
    %333 = vmatprep.mubr.bf16.mxu0 0
    %334 = vmatmul.mubr.bf16.gmra.mrb[0].mxu0 %v208
    %v335 = vpop.f32.mrb[0].mxu0
    %v336 = vadd.f32 %v235, %v335
    %v337 = vpop.f32.mrb[0].mxu0
    %v338 = vpop.f32.mrb[0].mxu0
    %v339 = vadd.f32 %v235, %v338
    %v340 = vpop.f32.mrb[0].mxu0
    %341 = vmatprep.mubr.bf16.mxu0 0
    %342 = vmatmul.mubr.bf16.gmra.mrb[0].mxu0 %v209
    %v343 = vpop.f32.mrb[0].mxu0
    %v344 = vadd.f32 %v235, %v343
    %v345 = vpop.f32.mrb[0].mxu0
    %v346 = vpop.f32.mrb[0].mxu0
    %v347 = vadd.f32 %v235, %v346
    %v348 = vpop.f32.mrb[0].mxu0
    %349 = vmatprep.mubr.bf16.mxu0 0
    %350 = vmatmul.mubr.bf16.gmra.mrb[0].mxu0 %v210
    %v351 = vpop.f32.mrb[0].mxu0
    %v352 = vadd.f32 %v235, %v351
    %v353 = vpop.f32.mrb[0].mxu0
    %v354 = vpop.f32.mrb[0].mxu0
    %v355 = vadd.f32 %v235, %v354
    %v356 = vpop.f32.mrb[0].mxu0
    %357 = vmatprep.mubr.bf16.mxu0 0
    %358 = vmatmul.mubr.bf16.gmra.mrb[0].mxu0 %v211
    %v359 = vpop.f32.mrb[0].mxu0
    %v360 = vadd.f32 %v235, %v359
    %v361 = vpop.f32.mrb[0].mxu0
    %v362 = vpop.f32.mrb[0].mxu0
    %v363 = vadd.f32 %v235, %v362
    %v364 = vpop.f32.mrb[0].mxu0
    %365 = vmatprep.mubr.bf16.mxu0 0
    %366 = vmatmul.mubr.bf16.gmra.mrb[0].mxu0 %v212
    %v367 = vpop.f32.mrb[0].mxu0
    %v368 = vadd.f32 %v235, %v367
    %v369 = vpop.f32.mrb[0].mxu0
    %v370 = vpop.f32.mrb[0].mxu0
    %v371 = vadd.f32 %v235, %v370
    %v372 = vpop.f32.mrb[0].mxu0
    %373 = vmatprep.mubr.bf16.mxu0 0
    %374 = vmatmul.mubr.bf16.gmra.mrb[0].mxu0 %v213
    %v375 = vpop.f32.mrb[0].mxu0
    %v376 = vadd.f32 %v235, %v375
    %v377 = vpop.f32.mrb[0].mxu0
    %v378 = vpop.f32.mrb[0].mxu0
    %v379 = vadd.f32 %v235, %v378
    %v380 = vpop.f32.mrb[0].mxu0
    %381 = vdwg.mxu0
    %v382 = vmax.f32 %v320, 0.0
    %v383 = vmax.f32 %v323, 0.0
    %v384 = vmax.f32 %v328, 0.0
    %v385 = vmax.f32 %v331, 0.0
    %v386 = vmax.f32 %v336, 0.0
    %v387 = vmax.f32 %v339, 0.0
    %v388 = vmax.f32 %v344, 0.0
    %v389 = vmax.f32 %v347, 0.0
    %v390 = vmax.f32 %v352, 0.0
    %v391 = vmax.f32 %v355, 0.0
    %v392 = vmax.f32 %v360, 0.0
    %v393 = vmax.f32 %v363, 0.0
    %v394 = vmax.f32 %v368, 0.0
    %v395 = vmax.f32 %v371, 0.0
    %v396 = vmax.f32 %v376, 0.0
    %v397 = vmax.f32 %v379, 0.0
    %v398 = vpack.c.bf16 %v383, %v382
    %v399 = vpack.c.bf16 %v385, %v384
    %v400 = vpack.c.bf16 %v387, %v386
    %v401 = vpack.c.bf16 %v389, %v388
    %v402 = vpack.c.bf16 %v391, %v390
    %v403 = vpack.c.bf16 %v393, %v392
    %v404 = vpack.c.bf16 %v395, %v394
    %v405 = vpack.c.bf16 %v397, %v396
    %v406 = vld [vmem:[%s5] sm:$0x1]
    %s407 = sld [smem:[#allocation2]]
    %v408 = vstv %s407
    %409 = vmatprep.subr.bf16.mxu0 0
    %410 = vmatpush1.bf16.xpose.msra.mxu0 %v398
    %411 = vmatprep.subr.bf16.mxu0 0
    %412 = vmatpush1.bf16.xpose.msra.mxu0 %v399
    %413 = vmatprep.subr.bf16.mxu0 0
    %414 = vmatpush1.bf16.xpose.msra.mxu0 %v400
    %415 = vmatprep.subr.bf16.mxu0 0
    %416 = vmatpush1.bf16.xpose.msra.mxu0 %v401
    %417 = vmatprep.subr.bf16.mxu0 0
    %418 = vmatpush1.bf16.xpose.msra.mxu0 %v402
    %419 = vmatprep.subr.bf16.mxu0 0
    %420 = vmatpush1.bf16.xpose.msra.mxu0 %v403
    %421 = vmatprep.subr.bf16.mxu0 0
    %422 = vmatpush1.bf16.xpose.msra.mxu0 %v404
    %423 = vmatprep.subr.bf16.mxu0 0
    %424 = vmatpush1.bf16.xpose.msra.mxu0 %v405
    %425 = vmatprep.subr.bf16.mxu0 0
    %426 = vmatpush1.bf16.xpose.msra.mxu0 0
    %427 = vmatprep.subr.bf16.mxu0 0
    %428 = vmatpush1.bf16.xpose.msra.mxu0 0
    %429 = vmatprep.subr.bf16.mxu0 0
    %430 = vmatpush1.bf16.xpose.msra.mxu0 0
    %431 = vmatprep.subr.bf16.mxu0 0
    %432 = vmatpush1.bf16.xpose.msra.mxu0 0
    %433 = vmatprep.subr.bf16.mxu0 0
    %434 = vmatpush1.bf16.xpose.msra.mxu0 0
    %435 = vmatprep.subr.bf16.mxu0 0
    %436 = vmatpush1.bf16.xpose.msra.mxu0 0
    %437 = vmatprep.subr.bf16.mxu0 0
    %438 = vmatpush1.bf16.xpose.msra.mxu0 0
    %439 = vmatprep.subr.bf16.mxu0 0
    %440 = vmatpush1.bf16.xpose.msra.mxu0 0
    %441 = vmatprep.mubr.bf16.mxu0 0
    %442 = vmatmul.mubr.bf16.gmra.mrb[0].mxu0 %v406
    %v443 = vpop.f32.mrb[0].mxu0
    %v444 = vadd.f32 %v408, %v443
    %v445 = vpop.f32.mrb[0].mxu0
    %v446 = vpop.f32.mrb[0].mxu0
    %v447 = vpop.f32.mrb[0].mxu0
    %448 = vdwg.mxu0
    %449 = vst [vmem:[#allocation3] sm:$0x1] %v444
    // Predicated region
    $region30: #{qnetwork_forward.1} parent=1 // pred_check
      _
    $region31: #{qnetwork_forward.1} parent=1 // pred_check_branch
      %451 = sbr.rel (0) target = $region33
    $region32: #{qnetwork_forward.1} parent=1 // pred_region
      %s453 = ssub.s32 16, 16
      %454 = vsyncadd [#allocation4], %s453
      %s456 = sshll.u32 [#allocation3], 4
      %s457 = int_to_ptr.vmem [resolvable:$true] %s456
      %459 = dma.vmem_to_hbm [thread:$0]  %s457, 16, %s7, [#allocation4]
    $region33: #{qnetwork_forward.1} parent=1 // pred_fallthru
      _
    // Predicated region
    $region34: #{qnetwork_forward.1} parent=1 // pred_check
      _
    $region35: #{qnetwork_forward.1} parent=1 // pred_check_branch
      %461 = sbr.rel (0) target = $region37
    $region36: #{qnetwork_forward.1} parent=1 // pred_region
      %462 = dma.done [#allocation4], 16
    $region37: #{qnetwork_forward.1} parent=1 // pred_fallthru
      _
    %463 = vsyncpa [#allocation4], 1

</llo_original>
